<compile_context>
chip_gen: v7x
topology: tpu7x:2x2x1
jax: 0.10.0
libtpu: 0.0.40
codegen_flags: <defaults>
</compile_context>

<pallas_src>
import jax
import jax.numpy as jnp
from jax.experimental import pallas as pl
from jax.experimental.pallas import tpu as pltpu


def _round_up(n, m):
    return ((n + m - 1) // m) * m


def subspace_kernel(x_ref, wcat_ref, bcat_ref, w2_ref, b2_ref, o_ref):
    """Fused Subspace forward on one (batch, pixel-tile) block.

    x_ref   : [1, C_in, T]   input pixels (lane axis = pixels), native dtype
    wcat_ref: [2*C, C_in]    rows 0..C-1 = conv1, rows C.. = merged shortcuts
    bcat_ref: [2*C, 1]       f32
    w2_ref  : [C, C]         f32
    b2_ref  : [C, 1]         f32
    o_ref   : [1, C, T]
    """
    slope = jnp.float32(0.2)
    c = w2_ref.shape[0]

    # One MXU push for conv1 AND the merged (block + subspace) shortcut.
    # Native-dtype operands, f32 accumulation on the MXU.
    t = jnp.dot(wcat_ref[...], x_ref[0],
                preferred_element_type=jnp.float32) + bcat_ref[...]
    h1 = t[:c]          # conv1 pre-activation (free view: c % 8 == 0)
    sc = t[c:]          # x @ (w3+w4) + (b3+b4)

    # LeakyReLU(0.2) == max(h, 0.2*h)
    h1 = jnp.maximum(h1, slope * h1)
    h2 = jnp.dot(w2_ref[...], h1, preferred_element_type=jnp.float32) + b2_ref[...]
    h2 = jnp.maximum(h2, slope * h2)

    o_ref[0] = (h2 + sc).astype(o_ref.dtype)


def subspace_forward(x_nchw, params, *, tile_pix=8192, vmem_budget_bytes=20 << 20):
    """x_nchw: [B, C_in, H, W]. Returns [B, C_out, H, W]."""
    B, C_in, H, W = x_nchw.shape
    C_out = params["w1"].shape[0]
    HW = H * W
    dt = x_nchw.dtype
    itemsize = jnp.dtype(dt).itemsize

    # Pad output channels up to a sublane multiple (free view for the t split).
    C = _round_up(max(C_out, 8), 8)

    # ---- pixel-tile selection ------------------------------------------------
    # Lane-dense (multiple of 128), never longer than the 128-rounded row.
    tile_pix = max(128, _round_up(tile_pix, 128))
    tile_pix = min(tile_pix, _round_up(HW, 128))
    # VMEM budget: double-buffered x/out blocks + f32 temporaries (t, h1, h2, y).
    per_pix = 2 * (C_in + C) * itemsize + 5 * C * 4
    fit = max(128, (vmem_budget_bytes // per_pix) // 128 * 128)
    tile_pix = min(tile_pix, fit)
    # Keep enough grid steps for pipelining / megacore sharding (v7x = 2 TCs).
    while B * pl.cdiv(HW, tile_pix) < 8 and tile_pix > 512:
        tile_pix = _round_up(tile_pix // 2, 128)

    grid = (B, pl.cdiv(HW, tile_pix))

    # NCHW -> [B, C_in, H*W] is a pure reshape (no transpose, no pad). The
    # ragged last pixel tile is handled by Pallas (padded read, masked write).
    x3d = x_nchw.reshape(B, C_in, HW)

    # Fold the two shortcut convs (exact algebra), fuse with conv1, and pad
    # output-channel rows with zeros up to C.
    def pad_rows(w, rows):
        return jnp.pad(w, ((0, rows - w.shape[0]),) + ((0, 0),) * (w.ndim - 1))

    w_sc = pad_rows(params["w3"] + params["w4"], C)
    b_sc = pad_rows(params["b3"] + params["b4"], C)
    w1 = pad_rows(params["w1"], C)
    b1 = pad_rows(params["b1"], C)
    w2 = jnp.pad(params["w2"], ((0, C - C_out), (0, C - C_out)))
    b2 = pad_rows(params["b2"], C)

    wcat = jnp.concatenate([w1, w_sc], axis=0).astype(dt)             # [2C, C_in]
    bcat = jnp.concatenate([b1, b_sc], axis=0).reshape(2 * C, 1).astype(jnp.float32)
    w2 = w2.astype(jnp.float32)                                       # [C, C]
    b2 = b2.reshape(C, 1).astype(jnp.float32)

    out3d = pl.pallas_call(
        subspace_kernel,
        out_shape=jax.ShapeDtypeStruct((B, C, HW), dt),
        grid_spec=pltpu.PrefetchScalarGridSpec(
            num_scalar_prefetch=0,
            grid=grid,
            in_specs=[
                pl.BlockSpec((1, C_in, tile_pix), lambda b, p: (b, 0, p)),  # x tile
                pl.BlockSpec((2 * C, C_in), lambda b, p: (0, 0)),           # wcat (resident)
                pl.BlockSpec((2 * C, 1), lambda b, p: (0, 0)),              # bcat
                pl.BlockSpec((C, C), lambda b, p: (0, 0)),                  # w2
                pl.BlockSpec((C, 1), lambda b, p: (0, 0)),                  # b2
            ],
            out_specs=pl.BlockSpec((1, C, tile_pix), lambda b, p: (b, 0, p)),
        ),
        compiler_params=pltpu.CompilerParams(
            dimension_semantics=("parallel", "parallel"),
            vmem_limit_bytes=32 * 1024 * 1024,
        ),
    )(x3d, wcat, bcat, w2, b2)

    if C != C_out:
        out3d = out3d[:, :C_out, :]
    return out3d.reshape(B, C_out, H, W)


def init_params(key, in_size, out_size):
    """Deterministic synthetic parameters matching the PyTorch module.

    Conv2d(kernel=1) weight [C_out, C_in, 1, 1] is stored as [C_out, C_in];
    bias as [C_out].
    """
    ks = jax.random.split(key, 8)
    scale = 0.1
    return {
        # blocks.block[0]: Conv2d(in_size, out_size, 1)
        "w1": scale * jax.random.normal(ks[0], (out_size, in_size), jnp.float32),
        "b1": scale * jax.random.normal(ks[1], (out_size,), jnp.float32),
        # blocks.block[2]: Conv2d(out_size, out_size, 1)
        "w2": scale * jax.random.normal(ks[2], (out_size, out_size), jnp.float32),
        "b2": scale * jax.random.normal(ks[3], (out_size,), jnp.float32),
        # blocks.shortcut: Conv2d(in_size, out_size, 1)
        "w3": scale * jax.random.normal(ks[4], (out_size, in_size), jnp.float32),
        "b3": scale * jax.random.normal(ks[5], (out_size,), jnp.float32),
        # Subspace.shortcut: Conv2d(in_size, out_size, 1)
        "w4": scale * jax.random.normal(ks[6], (out_size, in_size), jnp.float32),
        "b4": scale * jax.random.normal(ks[7], (out_size,), jnp.float32),
    }


def subspace_reference(x_nchw, params):
    """Pure-JAX reference mirroring the PyTorch forward exactly (unmerged)."""
    B, C_in, H, W = x_nchw.shape
    x = x_nchw.reshape(B, C_in, H * W)

    def conv1x1(w, b, v):
        return jnp.einsum("oc,bcp->bop", w, v) + b[None, :, None]

    def lrelu(v):
        return jnp.where(v >= 0, v, 0.2 * v)

    h1 = lrelu(conv1x1(params["w1"], params["b1"], x))
    h2 = lrelu(conv1x1(params["w2"], params["b2"], h1))
    blk = h2 + conv1x1(params["w3"], params["b3"], x)
    y = blk + conv1x1(params["w4"], params["b4"], x)
    C_out = params["w1"].shape[0]
    return y.reshape(B, C_out, H, W)


if __name__ == "__main__":
    key = jax.random.PRNGKey(0)
    k_x, k_p = jax.random.split(key)

    B, C_in, C_out, H, W = 2, 4, 8, 16, 16
    x = jax.random.normal(k_x, (B, C_in, H, W), jnp.float32)
    params = init_params(k_p, C_in, C_out)

    out = subspace_forward(x, params)
    out = jax.block_until_ready(out)

    ref = subspace_reference(x, params)
    assert out.shape == (B, C_out, H, W)
    # Shortcut merge changes f32 rounding order slightly -> tolerance check.
    assert jnp.allclose(out, ref, atol=1e-5, rtol=1e-5), "mismatch vs reference"

    print("KERNEL_OK")
</pallas_src>

<mosaic_0001>
module attributes {stable_mosaic.version = 11 : i64} {
  func.func @subspace_kernel(%arg0: i32, %arg1: i32, %arg2: memref<1x4x256xf32, #tpu.memory_space<vmem>>, %arg3: memref<16x4xf32, #tpu.memory_space<vmem>>, %arg4: memref<16x1xf32, #tpu.memory_space<vmem>>, %arg5: memref<8x8xf32, #tpu.memory_space<vmem>>, %arg6: memref<8x1xf32, #tpu.memory_space<vmem>>, %arg7: memref<1x8x256xf32, #tpu.memory_space<vmem>>) attributes {dimension_semantics = [#tpu.dimension_semantics<parallel>, #tpu.dimension_semantics<parallel>], iteration_bounds = array<i64: 2, 1>, scalar_prefetch = 0 : i64, scratch_operands = 0 : i64, tpu.core_type = #tpu.core_type<tc>, window_params = [{transform_indices = @transform_0, window_bounds = array<i64: 1, 4, 256>}, {pipeline_mode = #tpu.pipeline_mode<synchronous>, transform_indices = @transform_1, window_bounds = array<i64: 16, 4>}, {pipeline_mode = #tpu.pipeline_mode<synchronous>, transform_indices = @transform_2, window_bounds = array<i64: 16, 1>}, {pipeline_mode = #tpu.pipeline_mode<synchronous>, transform_indices = @transform_3, window_bounds = array<i64: 8, 8>}, {pipeline_mode = #tpu.pipeline_mode<synchronous>, transform_indices = @transform_4, window_bounds = array<i64: 8, 1>}, {transform_indices = @transform_5, window_bounds = array<i64: 1, 8, 256>}]} {
    %c0 = arith.constant 0 : index
    %c0_0 = arith.constant 0 : index
    %0 = vector.load %arg3[%c0, %c0_0] : memref<16x4xf32, #tpu.memory_space<vmem>>, vector<16x4xf32>
    %c0_1 = arith.constant 0 : index
    %c0_2 = arith.constant 0 : index
    %c0_3 = arith.constant 0 : index
    %1 = vector.load %arg2[%c0_1, %c0_2, %c0_3] : memref<1x4x256xf32, #tpu.memory_space<vmem>>, vector<1x4x256xf32>
    %2 = vector.shape_cast %1 : vector<1x4x256xf32> to vector<4x256xf32>
    %cst = arith.constant dense<0.000000e+00> : vector<16x256xf32>
    %3 = tpu.matmul %0, %2, %cst {dimension_numbers = #tpu.dot_dimension_numbers<[1], [0], [0], [1], [0, 0, 1, 1], [], []>} : vector<16x4xf32>, vector<4x256xf32>, vector<16x256xf32> -> vector<16x256xf32>
    %c0_4 = arith.constant 0 : index
    %c0_5 = arith.constant 0 : index
    %4 = vector.load %arg4[%c0_4, %c0_5] : memref<16x1xf32, #tpu.memory_space<vmem>>, vector<16x1xf32>
    %5 = vector.broadcast %4 : vector<16x1xf32> to vector<16x256xf32>
    %6 = arith.addf %3, %5 : vector<16x256xf32>
    %7 = vector.extract_strided_slice %6 {offsets = [0, 0], sizes = [8, 256], strides = [1, 1]} : vector<16x256xf32> to vector<8x256xf32>
    %8 = vector.extract_strided_slice %6 {offsets = [8, 0], sizes = [8, 256], strides = [1, 1]} : vector<16x256xf32> to vector<8x256xf32>
    %cst_6 = arith.constant 2.000000e-01 : f32
    %9 = vector.broadcast %cst_6 : f32 to vector<8x256xf32>
    %10 = arith.mulf %9, %7 : vector<8x256xf32>
    %11 = arith.maximumf %7, %10 : vector<8x256xf32>
    %c0_7 = arith.constant 0 : index
    %c0_8 = arith.constant 0 : index
    %12 = vector.load %arg5[%c0_7, %c0_8] : memref<8x8xf32, #tpu.memory_space<vmem>>, vector<8x8xf32>
    %cst_9 = arith.constant dense<0.000000e+00> : vector<8x256xf32>
    %13 = tpu.matmul %12, %11, %cst_9 {dimension_numbers = #tpu.dot_dimension_numbers<[1], [0], [0], [1], [0, 0, 1, 1], [], []>} : vector<8x8xf32>, vector<8x256xf32>, vector<8x256xf32> -> vector<8x256xf32>
    %c0_10 = arith.constant 0 : index
    %c0_11 = arith.constant 0 : index
    %14 = vector.load %arg6[%c0_10, %c0_11] : memref<8x1xf32, #tpu.memory_space<vmem>>, vector<8x1xf32>
    %15 = vector.broadcast %14 : vector<8x1xf32> to vector<8x256xf32>
    %16 = arith.addf %13, %15 : vector<8x256xf32>
    %cst_12 = arith.constant 2.000000e-01 : f32
    %17 = vector.broadcast %cst_12 : f32 to vector<8x256xf32>
    %18 = arith.mulf %17, %16 : vector<8x256xf32>
    %19 = arith.maximumf %16, %18 : vector<8x256xf32>
    %20 = arith.addf %19, %8 : vector<8x256xf32>
    %c0_13 = arith.constant 0 : index
    %c0_14 = arith.constant 0 : index
    %c0_15 = arith.constant 0 : index
    %21 = vector.load %arg7[%c0_13, %c0_14, %c0_15] : memref<1x8x256xf32, #tpu.memory_space<vmem>>, vector<1x8x256xf32>
    %22 = vector.shape_cast %21 : vector<1x8x256xf32> to vector<8x256xf32>
    %23 = vector.shape_cast %20 : vector<8x256xf32> to vector<1x8x256xf32>
    tpu.vector_store %arg7[%c0_13, %c0_14, %c0_15], %23 {strides = array<i32>} : memref<1x8x256xf32, #tpu.memory_space<vmem>>, vector<1x8x256xf32>,
    return
  }
  func.func @transform_0(%arg0: i32, %arg1: i32) -> (i32, i32, i32) {
    %c0_i32 = arith.constant 0 : i32
    %c0_i32_0 = arith.constant 0 : i32
    return %arg0, %c0_i32, %arg1 : i32, i32, i32
  }
  func.func @transform_1(%arg0: i32, %arg1: i32) -> (i32, i32) {
    %c0_i32 = arith.constant 0 : i32
    %c0_i32_0 = arith.constant 0 : i32
    %c0_i32_1 = arith.constant 0 : i32
    return %c0_i32, %c0_i32_0 : i32, i32
  }
  func.func @transform_2(%arg0: i32, %arg1: i32) -> (i32, i32) {
    %c0_i32 = arith.constant 0 : i32
    %c0_i32_0 = arith.constant 0 : i32
    %c0_i32_1 = arith.constant 0 : i32
    return %c0_i32, %c0_i32_0 : i32, i32
  }
  func.func @transform_3(%arg0: i32, %arg1: i32) -> (i32, i32) {
    %c0_i32 = arith.constant 0 : i32
    %c0_i32_0 = arith.constant 0 : i32
    %c0_i32_1 = arith.constant 0 : i32
    return %c0_i32, %c0_i32_0 : i32, i32
  }
  func.func @transform_4(%arg0: i32, %arg1: i32) -> (i32, i32) {
    %c0_i32 = arith.constant 0 : i32
    %c0_i32_0 = arith.constant 0 : i32
    %c0_i32_1 = arith.constant 0 : i32
    return %c0_i32, %c0_i32_0 : i32, i32
  }
  func.func @transform_5(%arg0: i32, %arg1: i32) -> (i32, i32, i32) {
    %c0_i32 = arith.constant 0 : i32
    %c0_i32_0 = arith.constant 0 : i32
    return %arg0, %c0_i32, %arg1 : i32, i32, i32
  }
}

</mosaic_0001>

<llo_original>
// kernel: tpu_custom_call.1
$region0: #{tpu_custom_call.1}
  #allocation0 [shape = 'u32[]', space=smem, size = 0x4, offset = 0x4, fixed_abs, tag = 'smem constant byte address 0x4 - core index']
  #allocation1 [shape = 'u32[144,128]{1,0:T(1,128)}', space=vmem, size = 0x12000, scoped, tag = 'internal scratch']
  %s0 = inlined_call_operand.vmem [shape: f32[2,4,256], index: 0, kind: input, shape index: {}]
  %s1 = inlined_call_operand.vmem [shape: f32[16,4], index: 1, kind: input, shape index: {}]
  %s2 = inlined_call_operand.vmem [shape: f32[16,1], index: 2, kind: input, shape index: {}]
  %s3 = inlined_call_operand.vmem [shape: f32[8,8], index: 3, kind: input, shape index: {}]
  %s4 = inlined_call_operand.vmem [shape: f32[8,1], index: 4, kind: input, shape index: {}]
  %s5 = inlined_call_operand.hbm [shape: f32[2,8,256], index: 5, kind: output, shape index: {}]
  %s6 = sld [smem:[#allocation0]]
  $region53: #{tpu_custom_call.1} parent=0
    _
  %s8 = ssub.s32 1, %s6
  %s9 = scalar_select 0, %s8, %s6
  $region1: #{tpu_custom_call.1} parent=0
    #allocation2 [shape = 'u8[16384]{0}', space=vmem, size = 0x4000, scoped, tag = 'output window, operand 0']
    #allocation3 [shape = 's32[2]{0}', space=sflag, size = 0x8, scoped, tag = 'scoped memory for tpu_custom_call.1']
    %10 = vsyncpa [#allocation3], 0
    %s11 = scalar_lea.sflag [#allocation3], 1
    %12 = vsyncpa %s11, 0
    loop: start=0, step=1, limit=4
    $region2: #{tpu_custom_call.1} parent=1 // loop_pre_header
      _
    $region3: #{tpu_custom_call.1} parent=1 // loop_header
      %s14 = sphi 0, %s18
      %p15 = scmp.ge.s32.totalorder %s14, 4
      %s21 = sphi 0, %s33
      %s22 = sphi 0, %s29
      %s23 = sphi 0, %s21
      %s24 = sphi 0, %s22
      %s25 = sphi 0, %s23
      %s26 = sphi 0, %s24
      %s38 = sphi 0, %s40
      %s41 = sphi 0, %s38
      %s42 = sphi 0, %s41
      %s58 = sphi 0, %s42
      %s62 = sphi 0, %s62
      %s64 = sphi 0, %s62
      %s65 = sphi 0, %s64
      %s79 = sphi 0, %s65
      %s83 = sphi 0, %s83
      %s85 = sphi 0, %s83
      %s86 = sphi 0, %s85
      %s100 = sphi 0, %s86
      %s104 = sphi 0, %s104
      %s106 = sphi 0, %s104
      %s107 = sphi 0, %s106
      %s121 = sphi 0, %s107
      %s125 = sphi 0, %s125
      %s127 = sphi 0, %s125
      %s128 = sphi 0, %s127
      %s142 = sphi 0, %s128
      %s150 = sphi 0, %s152
      %s153 = sphi 0, %s150
      %s154 = sphi 0, %s153
      %s170 = sphi 0, %s154
    $region4: #{tpu_custom_call.1} parent=1 // loop_header_branch
      %17 = sbr.rel (%p15) target = $region8
    $region5: #{tpu_custom_call.1} parent=1 // loop_body
      %s19 = ssub.s32 %s14, 1
      %s20 = ssub.s32 %s14, 2
      %s27 = sadd.s32 1, %s22
      %p28 = scmp.ge.s32.totalorder %s27, 1
      %s29 = scalar_select %p28, 0, %s27
      %s30 = sadd.s32 1, %s21
      %s31 = scalar_select %p28, %s30, %s21
      %p32 = scmp.ge.s32.totalorder %s31, 2
      %s33 = scalar_select %p32, 0, %s31
      %s34 = ssub.s32 %s21, %s33
      %s35 = ssub.s32 %s22, %s29
      %s36 = sor.u32 %s34, %s35
      %p37 = scmp.eq.s32.totalorder %s36, 0
      %s39 = sadd.s32 %s38, 1
      %s40 = scalar_select %p37, %s38, %s39
      %p43 = pneg %p37
      %p44 = scmp.eq.s32.totalorder %s14, 1
      %p45 = por %p43, %p44
      %p46 = scmp.ne.s32.totalorder %s38, %s41
      %p47 = scmp.eq.s32.totalorder %s14, 0
      %p48 = por %p46, %p47
      %p49 = scmp.ne.s32.totalorder %s38, %s41
      %p50 = scmp.eq.s32.totalorder %s19, 1
      %p51 = por %p49, %p50
      %p52 = scmp.ne.s32.totalorder %s41, %s42
      %p53 = scmp.eq.s32.totalorder %s19, 0
      %p54 = por %p52, %p53
      %p55 = scmp.ne.s32.totalorder %s41, %s42
      %p56 = scmp.eq.s32.totalorder %s20, 1
      %p57 = por %p55, %p56
      %p59 = scmp.ne.s32.totalorder %s42, %s58
      %p60 = scmp.eq.s32.totalorder %s20, 0
      %p61 = por %p59, %p60
      %s63 = sadd.s32 %s62, 1
      %p66 = scmp.eq.s32.totalorder %s14, 1
      %p67 = scmp.ne.s32.totalorder %s62, %s64
      %p68 = scmp.eq.s32.totalorder %s14, 0
      %p69 = por %p67, %p68
      %p70 = scmp.ne.s32.totalorder %s62, %s64
      %p71 = scmp.eq.s32.totalorder %s19, 1
      %p72 = por %p70, %p71
      %p73 = scmp.ne.s32.totalorder %s64, %s65
      %p74 = scmp.eq.s32.totalorder %s19, 0
      %p75 = por %p73, %p74
      %p76 = scmp.ne.s32.totalorder %s64, %s65
      %p77 = scmp.eq.s32.totalorder %s20, 1
      %p78 = por %p76, %p77
      %p80 = scmp.ne.s32.totalorder %s65, %s79
      %p81 = scmp.eq.s32.totalorder %s20, 0
      %p82 = por %p80, %p81
      %s84 = sadd.s32 %s83, 1
      %p87 = scmp.eq.s32.totalorder %s14, 1
      %p88 = scmp.ne.s32.totalorder %s83, %s85
      %p89 = scmp.eq.s32.totalorder %s14, 0
      %p90 = por %p88, %p89
      %p91 = scmp.ne.s32.totalorder %s83, %s85
      %p92 = scmp.eq.s32.totalorder %s19, 1
      %p93 = por %p91, %p92
      %p94 = scmp.ne.s32.totalorder %s85, %s86
      %p95 = scmp.eq.s32.totalorder %s19, 0
      %p96 = por %p94, %p95
      %p97 = scmp.ne.s32.totalorder %s85, %s86
      %p98 = scmp.eq.s32.totalorder %s20, 1
      %p99 = por %p97, %p98
      %p101 = scmp.ne.s32.totalorder %s86, %s100
      %p102 = scmp.eq.s32.totalorder %s20, 0
      %p103 = por %p101, %p102
      %s105 = sadd.s32 %s104, 1
      %p108 = scmp.eq.s32.totalorder %s14, 1
      %p109 = scmp.ne.s32.totalorder %s104, %s106
      %p110 = scmp.eq.s32.totalorder %s14, 0
      %p111 = por %p109, %p110
      %p112 = scmp.ne.s32.totalorder %s104, %s106
      %p113 = scmp.eq.s32.totalorder %s19, 1
      %p114 = por %p112, %p113
      %p115 = scmp.ne.s32.totalorder %s106, %s107
      %p116 = scmp.eq.s32.totalorder %s19, 0
      %p117 = por %p115, %p116
      %p118 = scmp.ne.s32.totalorder %s106, %s107
      %p119 = scmp.eq.s32.totalorder %s20, 1
      %p120 = por %p118, %p119
      %p122 = scmp.ne.s32.totalorder %s107, %s121
      %p123 = scmp.eq.s32.totalorder %s20, 0
      %p124 = por %p122, %p123
      %s126 = sadd.s32 %s125, 1
      %p129 = scmp.eq.s32.totalorder %s14, 1
      %p130 = scmp.ne.s32.totalorder %s125, %s127
      %p131 = scmp.eq.s32.totalorder %s14, 0
      %p132 = por %p130, %p131
      %p133 = scmp.ne.s32.totalorder %s125, %s127
      %p134 = scmp.eq.s32.totalorder %s19, 1
      %p135 = por %p133, %p134
      %p136 = scmp.ne.s32.totalorder %s127, %s128
      %p137 = scmp.eq.s32.totalorder %s19, 0
      %p138 = por %p136, %p137
      %p139 = scmp.ne.s32.totalorder %s127, %s128
      %p140 = scmp.eq.s32.totalorder %s20, 1
      %p141 = por %p139, %p140
      %p143 = scmp.ne.s32.totalorder %s128, %s142
      %p144 = scmp.eq.s32.totalorder %s20, 0
      %p145 = por %p143, %p144
      %s146 = ssub.s32 %s21, %s33
      %s147 = ssub.s32 %s22, %s29
      %s148 = sor.u32 %s146, %s147
      %p149 = scmp.eq.s32.totalorder %s148, 0
      %s151 = sadd.s32 %s150, 1
      %s152 = scalar_select %p149, %s150, %s151
      %p155 = pneg %p149
      %p156 = scmp.eq.s32.totalorder %s14, 1
      %p157 = por %p155, %p156
      %p158 = scmp.ne.s32.totalorder %s150, %s153
      %p159 = scmp.eq.s32.totalorder %s14, 0
      %p160 = por %p158, %p159
      %p161 = scmp.ne.s32.totalorder %s150, %s153
      %p162 = scmp.eq.s32.totalorder %s19, 1
      %p163 = por %p161, %p162
      %p164 = scmp.ne.s32.totalorder %s153, %s154
      %p165 = scmp.eq.s32.totalorder %s19, 0
      %p166 = por %p164, %p165
      %p167 = scmp.ne.s32.totalorder %s153, %s154
      %p168 = scmp.eq.s32.totalorder %s20, 1
      %p169 = por %p167, %p168
      %p171 = scmp.ne.s32.totalorder %s154, %s170
      %p172 = scmp.eq.s32.totalorder %s20, 0
      %p173 = por %p171, %p172
      %p174 = scmp.le.s32.totalorder 1, %s14
      %p175 = scmp.lt.s32.totalorder %s14, 3
      %p176 = pnand %p174, %p175
      %p177 = pneg %p176
      // Predicated region
      $region9: #{tpu_custom_call.1} parent=5 // pred_check
        _
      $region10: #{tpu_custom_call.1} parent=5 // pred_check_branch
        %179 = sbr.rel (%p176) target = $region12
      $region11: #{tpu_custom_call.1} parent=5 // pred_region
        %s180 = ssub.s32 %s14, 1
        // Predicated region
        $region13: #{tpu_custom_call.1} parent=11 // pred_check
          %p181 = pneg %p75
        $region14: #{tpu_custom_call.1} parent=11 // pred_check_branch
          %183 = sbr.rel (%p181) target = $region16
        $region15: #{tpu_custom_call.1} parent=11 // pred_region
          _
        $region16: #{tpu_custom_call.1} parent=11 // pred_fallthru
          _
        // Predicated region
        $region17: #{tpu_custom_call.1} parent=11 // pred_check
          %p184 = pneg %p96
        $region18: #{tpu_custom_call.1} parent=11 // pred_check_branch
          %186 = sbr.rel (%p184) target = $region20
        $region19: #{tpu_custom_call.1} parent=11 // pred_region
          _
        $region20: #{tpu_custom_call.1} parent=11 // pred_fallthru
          _
        // Predicated region
        $region21: #{tpu_custom_call.1} parent=11 // pred_check
          %p187 = pneg %p117
        $region22: #{tpu_custom_call.1} parent=11 // pred_check_branch
          %189 = sbr.rel (%p187) target = $region24
        $region23: #{tpu_custom_call.1} parent=11 // pred_region
          _
        $region24: #{tpu_custom_call.1} parent=11 // pred_fallthru
          _
        // Predicated region
        $region25: #{tpu_custom_call.1} parent=11 // pred_check
          %p190 = pneg %p138
        $region26: #{tpu_custom_call.1} parent=11 // pred_check_branch
          %192 = sbr.rel (%p190) target = $region28
        $region27: #{tpu_custom_call.1} parent=11 // pred_region
          _
        $region28: #{tpu_custom_call.1} parent=11 // pred_fallthru
          _
      $region12: #{tpu_custom_call.1} parent=5 // pred_fallthru
        _
      %p193 = scmp.lt.s32.totalorder %s14, 2
      // Predicated region
      $region29: #{tpu_custom_call.1} parent=5 // pred_check
        %p194 = pneg %p193
      $region30: #{tpu_custom_call.1} parent=5 // pred_check_branch
        %196 = sbr.rel (%p194) target = $region32
      $region31: #{tpu_custom_call.1} parent=5 // pred_region
        // Predicated region
        $region33: #{tpu_custom_call.1} parent=31 // pred_check
          %p197 = pneg %p48
        $region34: #{tpu_custom_call.1} parent=31 // pred_check_branch
          %199 = sbr.rel (%p197) target = $region36
        $region35: #{tpu_custom_call.1} parent=31 // pred_region
          %s200 = smul.u32 2, %s22
          %p201 = scmp.lt.s32.totalorder %s21, 1
          %s202 = scalar_select %p201, %s21, 1
          %p203 = scmp.lt.s32.totalorder %s200, 1
          %s204 = scalar_select %p203, %s200, 1
          %s205 = smul.addr %s202, 2
          %s206 = sadd.s32 %s204, %s205
          %s207 = smul.addr %s206, 4
          %s208 = scalar_lea.vmem %s0, %s207
          %s209 = smul.u32 2, %s22
        $region36: #{tpu_custom_call.1} parent=31 // pred_fallthru
          _
      $region32: #{tpu_custom_call.1} parent=5 // pred_fallthru
        _
      %p210 = scmp.le.s32.totalorder 1, %s14
      %p211 = scmp.lt.s32.totalorder %s14, 3
      %p212 = pnand %p210, %p211
      %p213 = pneg %p212
      // Predicated region
      $region37: #{tpu_custom_call.1} parent=5 // pred_check
        _
      $region38: #{tpu_custom_call.1} parent=5 // pred_check_branch
        %215 = sbr.rel (%p212) target = $region40
      $region39: #{tpu_custom_call.1} parent=5 // pred_region
        %s216 = ssub.s32 %s14, 1
        %s217 = smul.u32 2, %s24
        %p218 = scmp.lt.s32.totalorder %s23, 1
        %s219 = scalar_select %p218, %s23, 1
        %p220 = scmp.lt.s32.totalorder %s217, 1
        %s221 = scalar_select %p220, %s217, 1
        %s222 = smul.addr %s219, 2
        %s223 = sadd.s32 %s221, %s222
        %s224 = smul.addr %s223, 4
        %s225 = scalar_lea.vmem %s0, %s224
        %p226 = pneg %p54
        %p227 = pneg %p51
        %p228 = pneg %p75
        %p229 = pneg %p72
        %p230 = pneg %p96
        %p231 = pneg %p93
        %p232 = pneg %p117
        %p233 = pneg %p114
        %p234 = pneg %p138
        %p235 = pneg %p135
        %p236 = pneg %p166
        %p237 = pneg %p163
        %s238 = sand.u32 %s153, 1
        %s239 = scalar_lea.sflag [#allocation3], %s238
        %s240 = sand.u32 %s153, 1
        %s241 = smul.addr %s240, 16
        %s242 = scalar_lea.vmem [#allocation2], %s241
        %s243 = smul.u32 2, %s24
        %p244 = scmp.lt.s32.totalorder %s23, 1
        %s245 = scalar_select %p244, %s23, 1
        %p246 = scmp.lt.s32.totalorder %s243, 1
        %s247 = scalar_select %p246, %s243, 1
        %s248 = smul.addr %s245, 2
        %s249 = sadd.s32 %s247, %s248
        %s250 = smul.addr %s249, 4
        %s251 = scalar_lea.vmem %s0, %s250
        %s252 = smul.u32 2, %s24
        %s253 = smul.u32 2, %s24
        %v254 = vld [vmem:[%s1] sm:$0xff]
        %v255 = vld [vmem:[%s1 + $0x8] sm:$0xff]
        %v256 = vld [vmem:[%s251] sm:$0xff]
        %v257 = vld [vmem:[%s2] sm:$0xff]
        %v258 = vld [vmem:[%s2 + $0x8] sm:$0xff]
        %260 = vset.pattern.permute.xlu0 0
        %261 = vperm.xlu0 %260, %v257
        %v262 = vpop.permute.xlu0 %261
        %265 = vset.pattern.permute.xlu0 0
        %266 = vperm.xlu0 %265, %v258
        %v267 = vpop.permute.xlu0 %266
        %v270 = vcombine.high %v256, %v256
        %vm271 = vcmask 31744
        %v273 = vsel %vm271, %v254, 0
        %v276 = vsel %vm271, %v255, 0
        %vm278 = vcmask 1043456
        %v279 = vsel %vm278, %v256, 0
        %v281 = vsel %vm278, %v270, 0
        %283 = vmatprep.subr.mxu0 %v281
        %284 = vmatpush1.msra.mxu0 %v279
        %285 = vmatprep.subr.mxu0 0.0
        %286 = vmatpush1.msra.mxu0 0.0
        %287 = vmatprep.subr.mxu0 0.0
        %288 = vmatpush1.msra.mxu0 0.0
        %289 = vmatprep.subr.mxu0 0.0
        %290 = vmatpush1.msra.mxu0 0.0
        %291 = vmatprep.subr.mxu0 0.0
        %292 = vmatpush1.msra.mxu0 0.0
        %293 = vmatprep.subr.mxu0 0.0
        %294 = vmatpush1.msra.mxu0 0.0
        %295 = vmatprep.subr.mxu0 0.0
        %296 = vmatpush1.msra.mxu0 0.0
        %297 = vmatprep.subr.mxu0 0.0
        %298 = vmatpush1.msra.mxu0 0.0
        %299 = vmatprep.subr.mxu0 0.0
        %300 = vmatpush1.msra.mxu0 0.0
        %301 = vmatprep.subr.mxu0 0.0
        %302 = vmatpush1.msra.mxu0 0.0
        %303 = vmatprep.subr.mxu0 0.0
        %304 = vmatpush1.msra.mxu0 0.0
        %305 = vmatprep.subr.mxu0 0.0
        %306 = vmatpush1.msra.mxu0 0.0
        %307 = vmatprep.subr.mxu0 0.0
        %308 = vmatpush1.msra.mxu0 0.0
        %309 = vmatprep.subr.mxu0 0.0
        %310 = vmatpush1.msra.mxu0 0.0
        %311 = vmatprep.subr.mxu0 0.0
        %312 = vmatpush1.msra.mxu0 0.0
        %313 = vmatprep.subr.mxu0 0.0
        %314 = vmatpush1.msra.mxu0 0.0
        %315 = vmatprep.subr.mxu0 0.0
        %316 = vmatpush1.msra.mxu0 0.0
        %317 = vmatprep.subr.mxu0 0.0
        %318 = vmatpush1.msra.mxu0 0.0
        %319 = vmatprep.subr.mxu0 0.0
        %320 = vmatpush1.msra.mxu0 0.0
        %321 = vmatprep.subr.mxu0 0.0
        %322 = vmatpush1.msra.mxu0 0.0
        %323 = vmatprep.subr.mxu0 0.0
        %324 = vmatpush1.msra.mxu0 0.0
        %325 = vmatprep.subr.mxu0 0.0
        %326 = vmatpush1.msra.mxu0 0.0
        %327 = vmatprep.subr.mxu0 0.0
        %328 = vmatpush1.msra.mxu0 0.0
        %329 = vmatprep.subr.mxu0 0.0
        %330 = vmatpush1.msra.mxu0 0.0
        %331 = vmatprep.subr.mxu0 0.0
        %332 = vmatpush1.msra.mxu0 0.0
        %333 = vmatprep.subr.mxu0 0.0
        %334 = vmatpush1.msra.mxu0 0.0
        %335 = vmatprep.subr.mxu0 0.0
        %336 = vmatpush1.msra.mxu0 0.0
        %337 = vmatprep.subr.mxu0 0.0
        %338 = vmatpush1.msra.mxu0 0.0
        %339 = vmatprep.subr.mxu0 0.0
        %340 = vmatpush1.msra.mxu0 0.0
        %341 = vmatprep.subr.mxu0 0.0
        %342 = vmatpush1.msra.mxu0 0.0
        %343 = vmatprep.subr.mxu0 0.0
        %344 = vmatpush1.msra.mxu0 0.0
        %345 = vmatprep.subr.mxu0 0.0
        %346 = vmatpush1.msra.mxu0 0.0
        %347 = vmatprep.mubr.f32.mxu0 0.0
        %348 = vmatmul.mubr.f32.gmra.mrb[0].mxu0 %v273
        %v349 = vpop.f32.mrb[0].mxu0
        %v350 = vadd.f32 %v262, %v349
        %v351 = vpop.f32.mrb[0].mxu0
        %v352 = vadd.f32 %v262, %v351
        %353 = vmatprep.mubr.f32.mxu0 0.0
        %354 = vmatmul.mubr.f32.gmra.mrb[0].mxu0 %v276
        %v355 = vpop.f32.mrb[0].mxu0
        %v356 = vadd.f32 %v267, %v355
        %v357 = vpop.f32.mrb[0].mxu0
        %v358 = vadd.f32 %v267, %v357
        %359 = vdwg.mxu0
        %v360 = vmul.f32 %v350, 0.2
        %v361 = vmul.f32 %v352, 0.2
        %v362 = vmax.f32 %v350, %v360
        %v363 = vmax.f32 %v352, %v361
        %v364 = vld [vmem:[%s3] sm:$0xff]
        %v365 = vld [vmem:[%s4] sm:$0xff]
        %367 = vset.pattern.permute.xlu0 0
        %368 = vperm.xlu0 %367, %v365
        %v369 = vpop.permute.xlu0 %368
        %vm371 = vcmask 64512
        %v373 = vsel %vm371, %v364, 0
        %375 = vmatprep.subr.mxu0 %v363
        %376 = vmatpush1.msra.mxu0 %v362
        %377 = vmatprep.subr.mxu0 0.0
        %378 = vmatpush1.msra.mxu0 0.0
        %379 = vmatprep.subr.mxu0 0.0
        %380 = vmatpush1.msra.mxu0 0.0
        %381 = vmatprep.subr.mxu0 0.0
        %382 = vmatpush1.msra.mxu0 0.0
        %383 = vmatprep.subr.mxu0 0.0
        %384 = vmatpush1.msra.mxu0 0.0
        %385 = vmatprep.subr.mxu0 0.0
        %386 = vmatpush1.msra.mxu0 0.0
        %387 = vmatprep.subr.mxu0 0.0
        %388 = vmatpush1.msra.mxu0 0.0
        %389 = vmatprep.subr.mxu0 0.0
        %390 = vmatpush1.msra.mxu0 0.0
        %391 = vmatprep.subr.mxu0 0.0
        %392 = vmatpush1.msra.mxu0 0.0
        %393 = vmatprep.subr.mxu0 0.0
        %394 = vmatpush1.msra.mxu0 0.0
        %395 = vmatprep.subr.mxu0 0.0
        %396 = vmatpush1.msra.mxu0 0.0
        %397 = vmatprep.subr.mxu0 0.0
        %398 = vmatpush1.msra.mxu0 0.0
        %399 = vmatprep.subr.mxu0 0.0
        %400 = vmatpush1.msra.mxu0 0.0
        %401 = vmatprep.subr.mxu0 0.0
        %402 = vmatpush1.msra.mxu0 0.0
        %403 = vmatprep.subr.mxu0 0.0
        %404 = vmatpush1.msra.mxu0 0.0
        %405 = vmatprep.subr.mxu0 0.0
        %406 = vmatpush1.msra.mxu0 0.0
        %407 = vmatprep.subr.mxu0 0.0
        %408 = vmatpush1.msra.mxu0 0.0
        %409 = vmatprep.subr.mxu0 0.0
        %410 = vmatpush1.msra.mxu0 0.0
        %411 = vmatprep.subr.mxu0 0.0
        %412 = vmatpush1.msra.mxu0 0.0
        %413 = vmatprep.subr.mxu0 0.0
        %414 = vmatpush1.msra.mxu0 0.0
        %415 = vmatprep.subr.mxu0 0.0
        %416 = vmatpush1.msra.mxu0 0.0
        %417 = vmatprep.subr.mxu0 0.0
        %418 = vmatpush1.msra.mxu0 0.0
        %419 = vmatprep.subr.mxu0 0.0
        %420 = vmatpush1.msra.mxu0 0.0
        %421 = vmatprep.subr.mxu0 0.0
        %422 = vmatpush1.msra.mxu0 0.0
        %423 = vmatprep.subr.mxu0 0.0
        %424 = vmatpush1.msra.mxu0 0.0
        %425 = vmatprep.subr.mxu0 0.0
        %426 = vmatpush1.msra.mxu0 0.0
        %427 = vmatprep.subr.mxu0 0.0
        %428 = vmatpush1.msra.mxu0 0.0
        %429 = vmatprep.subr.mxu0 0.0
        %430 = vmatpush1.msra.mxu0 0.0
        %431 = vmatprep.subr.mxu0 0.0
        %432 = vmatpush1.msra.mxu0 0.0
        %433 = vmatprep.subr.mxu0 0.0
        %434 = vmatpush1.msra.mxu0 0.0
        %435 = vmatprep.subr.mxu0 0.0
        %436 = vmatpush1.msra.mxu0 0.0
        %437 = vmatprep.subr.mxu0 0.0
        %438 = vmatpush1.msra.mxu0 0.0
        %439 = vmatprep.mubr.f32.mxu0 0.0
        %440 = vmatmul.mubr.f32.gmra.mrb[0].mxu0 %v373
        %v441 = vpop.f32.mrb[0].mxu0
        %v442 = vadd.f32 %v369, %v441
        %v443 = vpop.f32.mrb[0].mxu0
        %v444 = vadd.f32 %v369, %v443
        %445 = vdwg.mxu0
        %v446 = vmul.f32 %v442, 0.2
        %v447 = vmul.f32 %v444, 0.2
        %v448 = vmax.f32 %v442, %v446
        %v449 = vmax.f32 %v444, %v447
        %v450 = vadd.f32 %v448, %v356
        %v451 = vadd.f32 %v449, %v358
        %452 = vst [vmem:[%s242] sm:$0xff] %v450
        %453 = vst [vmem:[%s242 + $0x8] sm:$0xff] %v451
        %s454 = sand.u32 %s153, 1
        %s455 = scalar_lea.sflag [#allocation3], %s454
        %s456 = sand.u32 %s153, 1
        %s457 = smul.addr %s456, 16
        %s458 = scalar_lea.vmem [#allocation2], %s457
        // Predicated region
        $region41: #{tpu_custom_call.1} parent=39 // pred_check
          %p459 = pneg %p163
        $region42: #{tpu_custom_call.1} parent=39 // pred_check_branch
          %461 = sbr.rel (%p459) target = $region44
        $region43: #{tpu_custom_call.1} parent=39 // pred_region
          %s462 = smul.u32 2, %s24
          %s464 = ssub.s32 256, 256
          %465 = vsyncadd %s455, %s464
          %s466 = smul.addr %s23, 2
          %s467 = sadd.s32 %s462, %s466
          %s468 = smul.addr %s467, 128
          %s469 = scalar_lea.hbm %s5, %s468
          %s471 = sshll.u32 %s458, 4
          %s472 = int_to_ptr.vmem [resolvable:$true] %s471
          %474 = dma.vmem_to_hbm [thread:$0]  %s472, 256, %s469, %s455
        $region44: #{tpu_custom_call.1} parent=39 // pred_fallthru
          _
      $region40: #{tpu_custom_call.1} parent=5 // pred_fallthru
        _
      %p475 = scmp.le.s32.totalorder 2, %s14
      // Predicated region
      $region45: #{tpu_custom_call.1} parent=5 // pred_check
        %p476 = pneg %p475
      $region46: #{tpu_custom_call.1} parent=5 // pred_check_branch
        %478 = sbr.rel (%p476) target = $region48
      $region47: #{tpu_custom_call.1} parent=5 // pred_region
        %s479 = ssub.s32 %s14, 2
        // Predicated region
        $region49: #{tpu_custom_call.1} parent=47 // pred_check
          %p480 = pneg %p169
        $region50: #{tpu_custom_call.1} parent=47 // pred_check_branch
          %482 = sbr.rel (%p480) target = $region52
        $region51: #{tpu_custom_call.1} parent=47 // pred_region
          %s483 = sand.u32 %s154, 1
          %s484 = scalar_lea.sflag [#allocation3], %s483
          %s485 = sand.u32 %s154, 1
          %s486 = smul.addr %s485, 16
          %s487 = scalar_lea.vmem [#allocation2], %s486
          %488 = dma.done %s484, 256
        $region52: #{tpu_custom_call.1} parent=47 // pred_fallthru
          _
      $region48: #{tpu_custom_call.1} parent=5 // pred_fallthru
        _
    $region6: #{tpu_custom_call.1} parent=1 // loop_footer
      %s18 = sadd.s32 1, %s14
    $region7: #{tpu_custom_call.1} parent=1 // loop_footer_branch
      %13 = sbr.rel target = $region3
    $region8: #{tpu_custom_call.1} parent=1 // loop_exit
      _
    %489 = vsyncpa [#allocation3], 1
    %s490 = scalar_lea.sflag [#allocation3], 1
    %491 = vsyncpa %s490, 1

</llo_original>
